<compile_context>
chip_gen: v7x
topology: tpu7x:2x2x1
jax: 0.10.0
libtpu: 0.0.40
codegen_flags: <defaults>
</compile_context>

<pallas_src>
import functools

import numpy as np
import jax
import jax.numpy as jnp
from jax.experimental import pallas as pl
from jax.experimental.pallas import tpu as pltpu


_TARGET_BLOCK_ELEMS = 256 * 1024          # ~1 MiB per f32 block per grid step
_VMEM_LIMIT_BYTES = 32 * 1024 * 1024      # safe on v5e/v6e and v7x (64 MiB phys)


# ----------------------------------------------------------------------------
# Pallas kernel
# ----------------------------------------------------------------------------
def _mad_act_quant_kernel(med_ref, delta_ref, inv_delta_ref, zp_ref,
                          x_ref, o_ref, *, n_medians, n_deltas, n_levels,
                          cascade):
    """Grouped fake-quant / dequant of one (row_tile, lanes) tile."""
    x = x_ref[...].astype(jnp.float32)     # promote inside the kernel only
    x_abs = jnp.abs(x)

    if n_deltas == 1:
        # Single group: scalars broadcast for free.
        delta = delta_ref[0]
        inv_delta = inv_delta_ref[0]
        zp = zp_ref[0]
    elif cascade:
        # Medians are non-decreasing (host-verified), so the clamped group
        # index equals the highest g with |x| >= medians[g-1].  One compare +
        # three selects per group; no int counting, no clip, no equality tests.
        sel = x_abs >= med_ref[0]
        delta = jnp.where(sel, delta_ref[1], delta_ref[0])
        inv_delta = jnp.where(sel, inv_delta_ref[1], inv_delta_ref[0])
        zp = jnp.where(sel, zp_ref[1], zp_ref[0])
        for g in range(2, n_deltas):
            sel = x_abs >= med_ref[g - 1]
            delta = jnp.where(sel, delta_ref[g], delta)
            inv_delta = jnp.where(sel, inv_delta_ref[g], inv_delta)
            zp = jnp.where(sel, zp_ref[g], zp)
    else:
        # Fallback: literal group-index counting (valid for any median order;
        # mirrors the PyTorch forward exactly).
        gidx = jnp.zeros(x.shape, dtype=jnp.int32)
        for i in range(n_medians):
            gidx = gidx + (x_abs >= med_ref[i]).astype(jnp.int32)
        gidx = jnp.clip(gidx, 0, n_deltas - 1)
        delta = jnp.full(x.shape, delta_ref[0], dtype=jnp.float32)
        inv_delta = jnp.full(x.shape, inv_delta_ref[0], dtype=jnp.float32)
        zp = jnp.full(x.shape, zp_ref[0], dtype=jnp.float32)
        for g in range(1, n_deltas):
            sel = gidx == g
            delta = jnp.where(sel, delta_ref[g], delta)
            inv_delta = jnp.where(sel, inv_delta_ref[g], inv_delta)
            zp = jnp.where(sel, zp_ref[g], zp)

    x_int = jnp.round(x * inv_delta) + zp
    x_q = jnp.clip(x_int, 0.0, float(n_levels - 1))
    o_ref[...] = ((x_q - zp) * delta).astype(o_ref.dtype)


# ----------------------------------------------------------------------------
# Wrapper helpers
# ----------------------------------------------------------------------------
def _round_up(v, m):
    return (v + m - 1) // m * m


def _inv_deltas_f32(deltas):
    """Exact f32 reciprocals of the group deltas (host-side).

    Used by BOTH the Pallas kernel and the pure-JAX reference so the
    elementwise math is bit-identical between the two.
    """
    d = np.asarray(deltas, dtype=np.float32)
    return (np.float32(1.0) / d).astype(np.float32)


def _choose_layout(total, sublane):
    """Pick a lane-dense 2-D view (lanes, rows, pad_elems) of the flat tensor.

    Prefers a factorization with no padding at all; otherwise pads the flat
    array only up to the next multiple of (sublane * lanes) — never to a
    multiple of the row tile (the ragged last grid block is masked by Pallas).
    """
    for lanes in (1024, 512, 256, 128):
        if total % lanes == 0 and (total // lanes) % sublane == 0:
            return lanes, total // lanes, 0
    lanes = 512 if total >= 512 * sublane else 128
    rows = _round_up(pl.cdiv(total, lanes), sublane)
    return lanes, rows, rows * lanes - total


def _choose_row_tile(rows, lanes, sublane):
    """Row tile: ~1 MiB f32 blocks, but always >= 2 grid steps when possible
    (so the 'parallel' row axis can shard across v7x's two TensorCores)."""
    if rows <= sublane:
        return rows
    tile = max(sublane, _round_up(_TARGET_BLOCK_ELEMS // lanes, sublane))
    half = _round_up(pl.cdiv(rows, 2), sublane)
    return int(min(tile, half))


# ----------------------------------------------------------------------------
# Forward wrapper
# ----------------------------------------------------------------------------
def mad_act_quant_forward(x, medians, deltas, zero_points, *, n_bits=8):
    """Pallas implementation of BERTMADActQuantizer.forward given calibration."""
    n_levels = 2 ** n_bits
    n_medians = len(medians)
    n_deltas = len(deltas)
    if n_deltas == 0:
        # Degenerate calibration (no quantization groups): the PyTorch module
        # returns an all-zero tensor in this case.
        return jnp.zeros_like(x)

    med_np = np.asarray(medians, dtype=np.float32)
    dlt_np = np.asarray(deltas, dtype=np.float32)
    zp_np = np.asarray(zero_points, dtype=np.float32)
    inv_np = _inv_deltas_f32(deltas)

    # Cascaded threshold select is only valid when the full median list is
    # non-decreasing and there are at least as many medians as deltas (always
    # true for MAD outlier peeling); otherwise use the gidx-count fallback.
    monotone = n_medians <= 1 or bool(np.all(np.diff(med_np) >= 0.0))
    cascade = monotone and (n_medians >= n_deltas)

    orig_shape = x.shape
    orig_dtype = x.dtype
    itemsize = jnp.dtype(orig_dtype).itemsize
    sublane = max(8, 32 // itemsize)        # 8 for f32, 16 for bf16/f16
    total = int(np.prod(orig_shape))

    lanes, rows, pad = _choose_layout(total, sublane)
    row_tile = _choose_row_tile(rows, lanes, sublane)
    grid = (pl.cdiv(rows, row_tile),)

    if pad:
        x2d = jnp.pad(x.reshape(-1), (0, pad)).reshape(rows, lanes)
    else:
        x2d = x.reshape(rows, lanes)

    med = jnp.asarray(med_np)
    dlt = jnp.asarray(dlt_np)
    inv_dlt = jnp.asarray(inv_np)
    zps = jnp.asarray(zp_np)

    smem_spec = pl.BlockSpec(memory_space=pltpu.MemorySpace.SMEM)
    x_spec = pl.BlockSpec((row_tile, lanes), lambda i: (i, 0))
    o_spec = pl.BlockSpec((row_tile, lanes), lambda i: (i, 0))

    if cascade:
        ops_per_elem = 4 * max(n_deltas - 1, 0) + 8
    else:
        ops_per_elem = n_medians + 4 * max(n_deltas - 1, 0) + 10
    cost = pl.CostEstimate(
        flops=rows * lanes * ops_per_elem,
        transcendentals=0,
        bytes_accessed=2 * rows * lanes * itemsize,
    )

    out2d = pl.pallas_call(
        functools.partial(
            _mad_act_quant_kernel,
            n_medians=n_medians,
            n_deltas=n_deltas,
            n_levels=n_levels,
            cascade=cascade,
        ),
        out_shape=jax.ShapeDtypeStruct((rows, lanes), orig_dtype),
        grid=grid,
        in_specs=[smem_spec, smem_spec, smem_spec, smem_spec, x_spec],
        out_specs=o_spec,
        compiler_params=pltpu.CompilerParams(
            dimension_semantics=("parallel",),
            vmem_limit_bytes=_VMEM_LIMIT_BYTES,
        ),
        cost_estimate=cost,
    )(med, dlt, inv_dlt, zps, x2d)

    if pad:
        return out2d.reshape(-1)[:total].reshape(orig_shape)
    return out2d.reshape(orig_shape)


# ----------------------------------------------------------------------------
# Module wrapper (state + one-time host-side MAD calibration)
# ----------------------------------------------------------------------------
def _lower_median(a):
    """torch.median semantics: lower of the two middle elements."""
    s = np.sort(np.asarray(a).ravel())
    return np.float32(s[(s.size - 1) // 2])


class BERTMADActQuantizer:
    def __init__(self, n_bits: int = 8, channel_wise: bool = False,
                 max_iters: int = 10):
        assert 2 <= n_bits <= 8, "bitwidth not supported"
        self.n_bits = n_bits
        self.n_levels = 2 ** n_bits
        self.deltas = []
        self.zero_points = []
        self.medians = []
        self.thresholds = []
        self.outlier_values = []
        self.outlier_counts = []
        self.inited = False
        self.channel_wise = channel_wise
        self.max_iters = max_iters

    def set_inited(self, inited: bool = True):
        self.inited = inited

    def forward(self, x):
        if self.inited is False:
            self.init_quantization_scale(
                np.asarray(jax.device_get(x), dtype=np.float32),
                self.channel_wise)
            self.inited = True
        return mad_act_quant_forward(
            x, self.medians, self.deltas, self.zero_points, n_bits=self.n_bits)

    __call__ = forward

    def init_quantization_scale(self, x, channel_wise: bool = False):
        if channel_wise:
            raise NotImplementedError(
                "Channel-wise quantization not implemented for this method.")
        x_clone = np.array(x, dtype=np.float32, copy=True).reshape(-1)
        for _ in range(self.max_iters):
            non_zero = x_clone[x_clone != 0]
            if non_zero.size == 0:
                break
            abs_nz = np.abs(non_zero)
            median_val = _lower_median(abs_nz)
            mad = _lower_median(np.abs(abs_nz - median_val))
            threshold = np.float32(median_val + np.float32(3.0) * mad)
            self.medians.append(float(median_val))
            self.thresholds.append(float(threshold))
            outliers = np.abs(x_clone) > threshold
            self.outlier_values.append(x_clone[outliers].tolist())
            self.outlier_counts.append(int(outliers.sum()))
            inliers = x_clone[~outliers]
            if inliers.size >= x_clone.size:
                break
            delta, zero_point = self.compute_scale_zero_point(inliers)
            self.deltas.append(float(delta))
            self.zero_points.append(float(zero_point))
            x_clone[~outliers] = 0.0
        # TODO(synk): save_outlier_data() writes 'outliers.txt'; file I/O is
        # intentionally omitted in this self-contained script.

    def compute_scale_zero_point(self, x):
        x_min = np.float32(x.min())
        x_max = np.float32(x.max())
        delta = np.float32((x_max - x_min) / np.float32(self.n_levels - 1))
        zero_point = np.float32(np.round(-x_min / delta))
        return float(delta), float(zero_point)


# ----------------------------------------------------------------------------
# Pure-JAX reference (mirrors BERTMADActQuantizer.forward given the same
# calibrated parameters; uses the same precomputed f32 reciprocal as the
# kernel, which only differs from a true divide at exact round-half ties).
# ----------------------------------------------------------------------------
def _reference_forward(x, medians, deltas, zero_points, n_bits=8):
    n_levels = 2 ** n_bits
    if len(deltas) == 0:
        return jnp.zeros_like(x)
    inv_deltas = _inv_deltas_f32(deltas)
    xf = x.astype(jnp.float32)
    x_abs = jnp.abs(xf)
    gidx = jnp.zeros(xf.shape, dtype=jnp.int32)
    for m in medians:
        gidx = gidx + (x_abs >= jnp.float32(np.float32(m))).astype(jnp.int32)
    gidx = jnp.clip(gidx, 0, len(deltas) - 1)
    out = jnp.zeros_like(xf)
    for g in range(len(deltas)):
        delta = jnp.float32(np.float32(deltas[g]))
        inv_delta = jnp.float32(inv_deltas[g])
        zp = jnp.float32(np.float32(zero_points[g]))
        x_int = jnp.round(xf * inv_delta) + zp
        x_q = jnp.clip(x_int, 0.0, float(n_levels - 1))
        x_dq = (x_q - zp) * delta
        out = jnp.where(gidx == g, x_dq, out)
    return out.astype(x.dtype)


if __name__ == "__main__":
    key = jax.random.PRNGKey(0)
    k1, k2 = jax.random.split(key)

    # Activation tensor shaped like BERT attention activations.
    x = jax.random.normal(k1, (2, 4, 16, 16), dtype=jnp.float32)

    q = BERTMADActQuantizer(n_bits=8, channel_wise=False, max_iters=10)

    # First call: one-time host-side MAD calibration + Pallas forward (f32,
    # no-padding layout, cascaded-threshold select path).
    out = jax.block_until_ready(q(x))
    assert out.shape == x.shape and out.dtype == x.dtype
    assert len(q.deltas) >= 1 and len(q.medians) >= len(q.deltas)

    ref = _reference_forward(x, q.medians, q.deltas, q.zero_points, n_bits=8)
    assert jnp.allclose(out, ref, atol=1e-5, rtol=1e-5), \
        float(jnp.max(jnp.abs(out - ref)))

    # Second call: reuse calibration on a bf16 activation whose size does not
    # factor cleanly -> exercises the minimal-pad / ragged-last-block /
    # multi-step (megacore-splittable) path.  HBM/DMA traffic stays bf16.
    x_bf16 = (1.5 * jax.random.normal(k2, (4, 197, 64), dtype=jnp.float32)
              ).astype(jnp.bfloat16)
    out_bf16 = jax.block_until_ready(
        mad_act_quant_forward(x_bf16, q.medians, q.deltas, q.zero_points,
                              n_bits=8))
    ref_bf16 = _reference_forward(x_bf16, q.medians, q.deltas, q.zero_points,
                                  n_bits=8)
    assert out_bf16.shape == x_bf16.shape and out_bf16.dtype == jnp.bfloat16
    assert jnp.allclose(out_bf16.astype(jnp.float32),
                        ref_bf16.astype(jnp.float32), atol=1e-2, rtol=1e-2)

    # Force the non-monotone-medians fallback path once (literal gidx count).
    med_nm, dlt_nm, zp_nm = [1.0, 0.25], [0.02, 0.05], [7.0, 3.0]
    out_nm = jax.block_until_ready(
        mad_act_quant_forward(x, med_nm, dlt_nm, zp_nm, n_bits=8))
    ref_nm = _reference_forward(x, med_nm, dlt_nm, zp_nm, n_bits=8)
    assert jnp.allclose(out_nm, ref_nm, atol=1e-5, rtol=1e-5)

    print("KERNEL_OK")
</pallas_src>

<mosaic_0001>
module attributes {stable_mosaic.version = 11 : i64} {
  func.func @_mad_act_quant_kernel(%arg0: i32, %arg1: memref<4xf32, #tpu.memory_space<smem>>, %arg2: memref<3xf32, #tpu.memory_space<smem>>, %arg3: memref<3xf32, #tpu.memory_space<smem>>, %arg4: memref<3xf32, #tpu.memory_space<smem>>, %arg5: memref<8x256xf32, #tpu.memory_space<vmem>>, %arg6: memref<8x256xf32, #tpu.memory_space<vmem>>) attributes {dimension_semantics = [#tpu.dimension_semantics<parallel>], iteration_bounds = array<i64: 1>, scalar_prefetch = 0 : i64, scratch_operands = 0 : i64, tpu.core_type = #tpu.core_type<tc>, window_params = [{transform_indices = @transform_0, window_bounds = array<i64: 4>}, {transform_indices = @transform_1, window_bounds = array<i64: 3>}, {transform_indices = @transform_2, window_bounds = array<i64: 3>}, {transform_indices = @transform_3, window_bounds = array<i64: 3>}, {transform_indices = @transform_4, window_bounds = array<i64: 8, 256>}, {transform_indices = @transform_5, window_bounds = array<i64: 8, 256>}]} {
    %c0 = arith.constant 0 : index
    %c0_0 = arith.constant 0 : index
    %0 = vector.load %arg5[%c0, %c0_0] : memref<8x256xf32, #tpu.memory_space<vmem>>, vector<8x256xf32>
    %1 = math.absf %0 : vector<8x256xf32>
    %c0_1 = arith.constant 0 : index
    %2 = memref.load %arg1[%c0_1] : memref<4xf32, #tpu.memory_space<smem>>
    %3 = vector.broadcast %2 : f32 to vector<8x256xf32>
    %4 = arith.cmpf oge, %1, %3 : vector<8x256xf32>
    %c1 = arith.constant 1 : index
    %5 = memref.load %arg2[%c1] : memref<3xf32, #tpu.memory_space<smem>>
    %c0_2 = arith.constant 0 : index
    %6 = memref.load %arg2[%c0_2] : memref<3xf32, #tpu.memory_space<smem>>
    %7 = vector.broadcast %5 : f32 to vector<8x256xf32>
    %8 = vector.broadcast %6 : f32 to vector<8x256xf32>
    %9 = arith.select %4, %7, %8 : vector<8x256xi1>, vector<8x256xf32>
    %c1_3 = arith.constant 1 : index
    %10 = memref.load %arg3[%c1_3] : memref<3xf32, #tpu.memory_space<smem>>
    %c0_4 = arith.constant 0 : index
    %11 = memref.load %arg3[%c0_4] : memref<3xf32, #tpu.memory_space<smem>>
    %12 = vector.broadcast %10 : f32 to vector<8x256xf32>
    %13 = vector.broadcast %11 : f32 to vector<8x256xf32>
    %14 = arith.select %4, %12, %13 : vector<8x256xi1>, vector<8x256xf32>
    %c1_5 = arith.constant 1 : index
    %15 = memref.load %arg4[%c1_5] : memref<3xf32, #tpu.memory_space<smem>>
    %c0_6 = arith.constant 0 : index
    %16 = memref.load %arg4[%c0_6] : memref<3xf32, #tpu.memory_space<smem>>
    %17 = vector.broadcast %15 : f32 to vector<8x256xf32>
    %18 = vector.broadcast %16 : f32 to vector<8x256xf32>
    %19 = arith.select %4, %17, %18 : vector<8x256xi1>, vector<8x256xf32>
    %c1_7 = arith.constant 1 : index
    %20 = memref.load %arg1[%c1_7] : memref<4xf32, #tpu.memory_space<smem>>
    %21 = vector.broadcast %20 : f32 to vector<8x256xf32>
    %22 = arith.cmpf oge, %1, %21 : vector<8x256xf32>
    %c2 = arith.constant 2 : index
    %23 = memref.load %arg2[%c2] : memref<3xf32, #tpu.memory_space<smem>>
    %24 = vector.broadcast %23 : f32 to vector<8x256xf32>
    %25 = arith.select %22, %24, %9 : vector<8x256xi1>, vector<8x256xf32>
    %c2_8 = arith.constant 2 : index
    %26 = memref.load %arg3[%c2_8] : memref<3xf32, #tpu.memory_space<smem>>
    %27 = vector.broadcast %26 : f32 to vector<8x256xf32>
    %28 = arith.select %22, %27, %14 : vector<8x256xi1>, vector<8x256xf32>
    %c2_9 = arith.constant 2 : index
    %29 = memref.load %arg4[%c2_9] : memref<3xf32, #tpu.memory_space<smem>>
    %30 = vector.broadcast %29 : f32 to vector<8x256xf32>
    %31 = arith.select %22, %30, %19 : vector<8x256xi1>, vector<8x256xf32>
    %32 = arith.mulf %0, %28 : vector<8x256xf32>
    %33 = math.roundeven %32 : vector<8x256xf32>
    %34 = arith.addf %33, %31 : vector<8x256xf32>
    %cst = arith.constant 0.000000e+00 : f32
    %cst_10 = arith.constant 2.550000e+02 : f32
    %35 = vector.broadcast %cst : f32 to vector<8x256xf32>
    %36 = arith.maximumf %35, %34 : vector<8x256xf32>
    %37 = vector.broadcast %cst_10 : f32 to vector<8x256xf32>
    %38 = arith.minimumf %37, %36 : vector<8x256xf32>
    %39 = arith.subf %38, %31 : vector<8x256xf32>
    %40 = arith.mulf %39, %25 : vector<8x256xf32>
    %c0_11 = arith.constant 0 : index
    %c0_12 = arith.constant 0 : index
    %41 = vector.load %arg6[%c0_11, %c0_12] : memref<8x256xf32, #tpu.memory_space<vmem>>, vector<8x256xf32>
    tpu.vector_store %arg6[%c0_11, %c0_12], %40 {strides = array<i32>} : memref<8x256xf32, #tpu.memory_space<vmem>>, vector<8x256xf32>,
    return
  }
  func.func @transform_0(%arg0: i32) -> i32 {
    %c0_i32 = arith.constant 0 : i32
    %c0_i32_0 = arith.constant 0 : i32
    return %c0_i32 : i32
  }
  func.func @transform_1(%arg0: i32) -> i32 {
    %c0_i32 = arith.constant 0 : i32
    %c0_i32_0 = arith.constant 0 : i32
    return %c0_i32 : i32
  }
  func.func @transform_2(%arg0: i32) -> i32 {
    %c0_i32 = arith.constant 0 : i32
    %c0_i32_0 = arith.constant 0 : i32
    return %c0_i32 : i32
  }
  func.func @transform_3(%arg0: i32) -> i32 {
    %c0_i32 = arith.constant 0 : i32
    %c0_i32_0 = arith.constant 0 : i32
    return %c0_i32 : i32
  }
  func.func @transform_4(%arg0: i32) -> (i32, i32) {
    %c0_i32 = arith.constant 0 : i32
    %c0_i32_0 = arith.constant 0 : i32
    return %arg0, %c0_i32 : i32, i32
  }
  func.func @transform_5(%arg0: i32) -> (i32, i32) {
    %c0_i32 = arith.constant 0 : i32
    %c0_i32_0 = arith.constant 0 : i32
    return %arg0, %c0_i32 : i32, i32
  }
}

</mosaic_0001>

<llo_original>
// kernel: tpu_custom_call.1
$region0: #{tpu_custom_call.1}
  #allocation0 [shape = 'u32[]', space=smem, size = 0x4, offset = 0x4, fixed_abs, tag = 'smem constant byte address 0x4 - core index']
  #allocation1 [shape = 'u32[144,128]{1,0:T(1,128)}', space=vmem, size = 0x12000, scoped, tag = 'internal scratch']
  %s0 = inlined_call_operand.hbm [shape: f32[4], index: 0, kind: input, shape index: {}]
  %s1 = inlined_call_operand.vmem [shape: f32[3], index: 1, kind: input, shape index: {}]
  %s2 = inlined_call_operand.vmem [shape: f32[3], index: 2, kind: input, shape index: {}]
  %s3 = inlined_call_operand.vmem [shape: f32[3], index: 3, kind: input, shape index: {}]
  %s4 = inlined_call_operand.hbm [shape: f32[8,256], index: 4, kind: input, shape index: {}]
  %s5 = inlined_call_operand.hbm [shape: f32[8,256], index: 5, kind: output, shape index: {}]
  %s6 = sld [smem:[#allocation0]]
  $region50: #{tpu_custom_call.1} parent=0
    _
  %s8 = ssub.s32 1, %s6
  %s9 = scalar_select 0, %s8, %s6
  $region1: #{tpu_custom_call.1} parent=0
    #allocation2 [shape = 'u8[512]{0}', space=smem, size = 0x200, scoped, tag = 'input window, operand 0, single buffered']
    #allocation3 [shape = 's32[1]{0}', space=sflag, size = 0x4, scoped, tag = 'scoped memory for tpu_custom_call.1']
    #allocation4 [shape = 's32[1]{0}', space=sflag, size = 0x4, scoped, tag = 'scoped memory for tpu_custom_call.1']
    #allocation5 [shape = 's32[1]{0}', space=sflag, size = 0x4, scoped, tag = 'scoped memory for tpu_custom_call.1']
    #allocation6 [shape = 's32[1]{0}', space=sflag, size = 0x4, scoped, tag = 'scoped memory for tpu_custom_call.1']
    #allocation7 [shape = 'u8[512]{0}', space=smem, size = 0x200, scoped, tag = 'input window, operand 1, single buffered']
    #allocation8 [shape = 'u8[512]{0}', space=smem, size = 0x200, scoped, tag = 'input window, operand 2, single buffered']
    #allocation9 [shape = 's32[1]{0}', space=sflag, size = 0x4, scoped, tag = 'scoped memory for tpu_custom_call.1']
    #allocation10 [shape = 'u8[512]{0}', space=smem, size = 0x200, scoped, tag = 'input window, operand 3, single buffered']
    #allocation11 [shape = 'u8[8192]{0}', space=vmem, size = 0x2000, scoped, tag = 'input window, operand 4, single buffered']
    #allocation12 [shape = 'u8[8192]{0}', space=vmem, size = 0x2000, scoped, tag = 'output window, operand 0, single buffered']
    %10 = vsyncpa [#allocation5], 0
    %11 = vsyncpa [#allocation6], 0
    %12 = vsyncpa [#allocation9], 0
    %13 = vsyncpa [#allocation3], 0
    %14 = vsyncpa [#allocation4], 0
    // Predicated region
    $region2: #{tpu_custom_call.1} parent=1 // pred_check
      _
    $region3: #{tpu_custom_call.1} parent=1 // pred_check_branch
      %16 = sbr.rel (0) target = $region5
    $region4: #{tpu_custom_call.1} parent=1 // pred_region
      %s18 = ssub.s32 16, 16
      %19 = vsyncadd [#allocation5], %s18
      %22 = dma.hbm_to_smem %s0, 16, [#allocation2], [#allocation5]
    $region5: #{tpu_custom_call.1} parent=1 // pred_fallthru
      _
    // Predicated region
    $region6: #{tpu_custom_call.1} parent=1 // pred_check
      _
    $region7: #{tpu_custom_call.1} parent=1 // pred_check_branch
      %24 = sbr.rel (0) target = $region9
    $region8: #{tpu_custom_call.1} parent=1 // pred_region
      %s26 = ssub.s32 16, 16
      %27 = vsyncadd [#allocation6], %s26
      %s29 = sshll.u32 %s1, 4
      %s30 = int_to_ptr.vmem [resolvable:$true] %s29
      %32 = dma.vmem_to_smem %s30, 16, [#allocation7], [#allocation6]
    $region9: #{tpu_custom_call.1} parent=1 // pred_fallthru
      _
    // Predicated region
    $region10: #{tpu_custom_call.1} parent=1 // pred_check
      _
    $region11: #{tpu_custom_call.1} parent=1 // pred_check_branch
      %34 = sbr.rel (0) target = $region13
    $region12: #{tpu_custom_call.1} parent=1 // pred_region
      %s36 = ssub.s32 16, 16
      %37 = vsyncadd [#allocation9], %s36
      %s39 = sshll.u32 %s2, 4
      %s40 = int_to_ptr.vmem [resolvable:$true] %s39
      %42 = dma.vmem_to_smem %s40, 16, [#allocation8], [#allocation9]
    $region13: #{tpu_custom_call.1} parent=1 // pred_fallthru
      _
    // Predicated region
    $region14: #{tpu_custom_call.1} parent=1 // pred_check
      _
    $region15: #{tpu_custom_call.1} parent=1 // pred_check_branch
      %44 = sbr.rel (0) target = $region17
    $region16: #{tpu_custom_call.1} parent=1 // pred_region
      %s46 = ssub.s32 16, 16
      %47 = vsyncadd [#allocation9], %s46
      %s49 = sshll.u32 %s3, 4
      %s50 = int_to_ptr.vmem [resolvable:$true] %s49
      %52 = dma.vmem_to_smem %s50, 16, [#allocation10], [#allocation9]
    $region17: #{tpu_custom_call.1} parent=1 // pred_fallthru
      _
    // Predicated region
    $region18: #{tpu_custom_call.1} parent=1 // pred_check
      _
    $region19: #{tpu_custom_call.1} parent=1 // pred_check_branch
      %54 = sbr.rel (0) target = $region21
    $region20: #{tpu_custom_call.1} parent=1 // pred_region
      %s56 = ssub.s32 256, 256
      %57 = vsyncadd [#allocation3], %s56
      %s59 = sshll.u32 [#allocation11], 4
      %s60 = int_to_ptr.vmem [resolvable:$true] %s59
      %62 = dma.hbm_to_vmem [thread:$0]  %s4, 256, %s60, [#allocation3]
    $region21: #{tpu_custom_call.1} parent=1 // pred_fallthru
      _
    // Predicated region
    $region22: #{tpu_custom_call.1} parent=1 // pred_check
      _
    $region23: #{tpu_custom_call.1} parent=1 // pred_check_branch
      %64 = sbr.rel (0) target = $region25
    $region24: #{tpu_custom_call.1} parent=1 // pred_region
      %65 = dma.done [#allocation5], 16
    $region25: #{tpu_custom_call.1} parent=1 // pred_fallthru
      _
    // Predicated region
    $region26: #{tpu_custom_call.1} parent=1 // pred_check
      _
    $region27: #{tpu_custom_call.1} parent=1 // pred_check_branch
      %67 = sbr.rel (0) target = $region29
    $region28: #{tpu_custom_call.1} parent=1 // pred_region
      %68 = dma.done [#allocation6], 16
    $region29: #{tpu_custom_call.1} parent=1 // pred_fallthru
      _
    // Predicated region
    $region30: #{tpu_custom_call.1} parent=1 // pred_check
      _
    $region31: #{tpu_custom_call.1} parent=1 // pred_check_branch
      %70 = sbr.rel (0) target = $region33
    $region32: #{tpu_custom_call.1} parent=1 // pred_region
      %71 = dma.done [#allocation9], 16
    $region33: #{tpu_custom_call.1} parent=1 // pred_fallthru
      _
    // Predicated region
    $region34: #{tpu_custom_call.1} parent=1 // pred_check
      _
    $region35: #{tpu_custom_call.1} parent=1 // pred_check_branch
      %73 = sbr.rel (0) target = $region37
    $region36: #{tpu_custom_call.1} parent=1 // pred_region
      %74 = dma.done [#allocation9], 16
    $region37: #{tpu_custom_call.1} parent=1 // pred_fallthru
      _
    // Predicated region
    $region38: #{tpu_custom_call.1} parent=1 // pred_check
      _
    $region39: #{tpu_custom_call.1} parent=1 // pred_check_branch
      %76 = sbr.rel (0) target = $region41
    $region40: #{tpu_custom_call.1} parent=1 // pred_region
      %77 = dma.done [#allocation3], 256
    $region41: #{tpu_custom_call.1} parent=1 // pred_fallthru
      _
    %78 = sfence
    %v79 = vld [vmem:[#allocation11] sm:$0xff]
    %v80 = vld [vmem:[#allocation11 + $0x8] sm:$0xff]
    %v81 = vand.u32 2147483647, %v79
    %v82 = vand.u32 2147483647, %v80
    %s83 = sld [smem:[#allocation2]]
    %v84 = vstv %s83
    %vm85 = vcmp.ge.f32.partialorder %v81, %v84
    %vm86 = vcmp.ge.f32.partialorder %v82, %v84
    %s87 = sld [smem:[#allocation7 + $0x1]]
    %s88 = sld [smem:[#allocation7]]
    %v89 = vstv %s87
    %v90 = vstv %s88
    %v91 = vsel %vm85, %v89, %v90
    %v92 = vsel %vm86, %v89, %v90
    %s93 = sld [smem:[#allocation8 + $0x1]]
    %s94 = sld [smem:[#allocation8]]
    %v95 = vstv %s93
    %v96 = vstv %s94
    %v97 = vsel %vm85, %v95, %v96
    %v98 = vsel %vm86, %v95, %v96
    %s99 = sld [smem:[#allocation10 + $0x1]]
    %s100 = sld [smem:[#allocation10]]
    %v101 = vstv %s99
    %v102 = vstv %s100
    %v103 = vsel %vm85, %v101, %v102
    %v104 = vsel %vm86, %v101, %v102
    %s105 = sld [smem:[#allocation2 + $0x1]]
    %v106 = vstv %s105
    %vm107 = vcmp.ge.f32.partialorder %v81, %v106
    %vm108 = vcmp.ge.f32.partialorder %v82, %v106
    %s109 = sld [smem:[#allocation7 + $0x2]]
    %v110 = vstv %s109
    %v111 = vsel %vm107, %v110, %v91
    %v112 = vsel %vm108, %v110, %v92
    %s113 = sld [smem:[#allocation8 + $0x2]]
    %v114 = vstv %s113
    %v115 = vsel %vm107, %v114, %v97
    %v116 = vsel %vm108, %v114, %v98
    %s117 = sld [smem:[#allocation10 + $0x2]]
    %v118 = vstv %s117
    %v119 = vsel %vm107, %v118, %v103
    %v120 = vsel %vm108, %v118, %v104
    %v121 = vmul.f32 %v79, %v115
    %v122 = vmul.f32 %v80, %v116
    %v123 = vround.ne.pseudo %v121
    %v124 = vround.ne.pseudo %v122
    %v125 = vadd.f32 %v123, %v119
    %v126 = vadd.f32 %v124, %v120
    %v127 = vmax.f32 %v125, 0.0
    %v128 = vmax.f32 %v126, 0.0
    %v129 = vmin.f32 %v127, 255.0
    %v130 = vmin.f32 %v128, 255.0
    %v131 = vsub.f32 %v129, %v119
    %v132 = vsub.f32 %v130, %v120
    %v133 = vmul.f32 %v131, %v111
    %v134 = vmul.f32 %v132, %v112
    %135 = vst [vmem:[#allocation12] sm:$0xff] %v133
    %136 = vst [vmem:[#allocation12 + $0x8] sm:$0xff] %v134
    // Predicated region
    $region42: #{tpu_custom_call.1} parent=1 // pred_check
      _
    $region43: #{tpu_custom_call.1} parent=1 // pred_check_branch
      %138 = sbr.rel (0) target = $region45
    $region44: #{tpu_custom_call.1} parent=1 // pred_region
      %s140 = ssub.s32 256, 256
      %141 = vsyncadd [#allocation4], %s140
      %s143 = sshll.u32 [#allocation12], 4
      %s144 = int_to_ptr.vmem [resolvable:$true] %s143
      %146 = dma.vmem_to_hbm [thread:$0]  %s144, 256, %s5, [#allocation4]
    $region45: #{tpu_custom_call.1} parent=1 // pred_fallthru
      _
    // Predicated region
    $region46: #{tpu_custom_call.1} parent=1 // pred_check
      _
    $region47: #{tpu_custom_call.1} parent=1 // pred_check_branch
      %148 = sbr.rel (0) target = $region49
    $region48: #{tpu_custom_call.1} parent=1 // pred_region
      %149 = dma.done [#allocation4], 256
    $region49: #{tpu_custom_call.1} parent=1 // pred_fallthru
      _
    %150 = vsyncpa [#allocation3], 1
    %151 = vsyncpa [#allocation4], 1
    %152 = vsyncpa [#allocation5], 1
    %153 = vsyncpa [#allocation6], 1
    %154 = vsyncpa [#allocation9], 1

</llo_original>
